<compile_context>
chip_gen: v7x
topology: tpu7x:2x2x1
jax: 0.10.0
libtpu: 0.0.40
codegen_flags: <defaults>
</compile_context>

<pallas_src>
import jax
import jax.numpy as jnp
from jax.experimental import pallas as pl
from jax.experimental.pallas import tpu as pltpu


LANE = 128      # TPU lane width: output features padded to a multiple of this
SUBLANE = 8     # f32 sublane width: batch rows padded to a multiple of this


def _round_up(x, m):
    return (x + m - 1) // m * m


def resnet_kernel(u_ref, logt_ref,
                  w0x_ref, w0t_ref, b0_ref,
                  whh_ref, wht_ref, bh_ref,
                  wfx_ref, wft_ref, bf_ref,
                  o_ref):
    """One batch tile of the full forward pass (all layers fused)."""
    u = u_ref[...]                         # (TB, input_dim)
    logt = logt_ref[...]                   # (TB, 1)
    w0x = w0x_ref[...]                     # (input_dim, H)

    def silu(z):
        return z * jax.nn.sigmoid(z)       # sigmoid -> EUP slot

    # ---- hoisted time-bias terms (computed once, not re-emitted per layer) ----
    t0 = logt * w0t_ref[...] + b0_ref[...]                      # (TB, H)
    tb = logt[None, :, :] * wht_ref[...] + bh_ref[...]          # (L, TB, H)
    tf = logt * wft_ref[...] + bf_ref[...]                      # (TB, OUT_PAD)

    # ---- layer 0: Linear(input_dim + 1, H) applied to cat([u, log t]) ---------
    input_dim = u.shape[1]
    if input_dim <= 8:
        # K is tiny: contract on the VPU, skip one MXU push/pop at the head of
        # the serial layer chain.
        h0 = t0
        for k in range(input_dim):
            h0 = h0 + u[:, k:k + 1] * w0x[k:k + 1, :]
    else:
        h0 = jnp.dot(u, w0x, preferred_element_type=jnp.float32) + t0
    h = silu(h0)

    # ---- hidden residual layers (statically unrolled, L is compile-time) ------
    n_hidden = whh_ref.shape[0]
    for i in range(n_hidden):
        h_new = jnp.dot(h, whh_ref[i], preferred_element_type=jnp.float32) + tb[i]
        h = silu(h + h_new)

    # ---- final layer: Linear(H + 1, out_dim) zero-init, lane-padded to OUT_PAD -
    o_ref[...] = jnp.dot(h, wfx_ref[...],
                         preferred_element_type=jnp.float32) + tf


def init_params(key, input_dim, index_dim, hidden_dim, n_hidden_layers, out_dim):
    """PyTorch-Linear-style uniform init; final layer zeroed (zero_module)."""
    def linear(key, fan_in, fan_out):
        kw, kb = jax.random.split(key)
        bound = 1.0 / jnp.sqrt(fan_in)
        w = jax.random.uniform(kw, (fan_in, fan_out), jnp.float32, -bound, bound)
        b = jax.random.uniform(kb, (1, fan_out), jnp.float32, -bound, bound)
        return w, b

    keys = jax.random.split(key, n_hidden_layers + 2)

    w0, b0 = linear(keys[0], input_dim + 1, hidden_dim)
    w0x, w0t = w0[:input_dim, :], w0[input_dim:input_dim + 1, :]

    whh, wht, bh = [], [], []
    for i in range(n_hidden_layers):
        w, b = linear(keys[1 + i], hidden_dim + index_dim, hidden_dim)
        whh.append(w[:hidden_dim, :])
        wht.append(w[hidden_dim:hidden_dim + 1, :])
        bh.append(b)
    whh = jnp.stack(whh)          # (L, hidden, hidden)
    wht = jnp.stack(wht)          # (L, 1, hidden)
    bh = jnp.stack(bh)            # (L, 1, hidden)

    # zero_module on the last layer
    wfx = jnp.zeros((hidden_dim, out_dim), jnp.float32)
    wft = jnp.zeros((1, out_dim), jnp.float32)
    bf = jnp.zeros((1, out_dim), jnp.float32)

    return dict(w0x=w0x, w0t=w0t, b0=b0, whh=whh, wht=wht, bh=bh,
                wfx=wfx, wft=wft, bf=bf)


def resnet_forward(x, v, t, params, *, batch_tile=None):
    # glue (concat of x/v, log-time embedding, padding) stays in plain JAX
    u = jnp.concatenate([x, v], axis=-1).astype(jnp.float32)     # (bs, input_dim)
    logt = jnp.log(t).reshape(-1, 1).astype(jnp.float32)         # (bs, 1)

    bs, input_dim = u.shape
    hidden = params["w0x"].shape[1]
    n_hidden = params["whh"].shape[0]
    out_dim = params["wfx"].shape[1]
    out_pad = _round_up(out_dim, LANE)

    # Lane-dense final layer: zero-pad out_dim -> out_pad (exact; padded columns
    # are sliced off below).
    wfx = jnp.zeros((hidden, out_pad), jnp.float32).at[:, :out_dim].set(params["wfx"])
    wft = jnp.zeros((1, out_pad), jnp.float32).at[:, :out_dim].set(params["wft"])
    bf = jnp.zeros((1, out_pad), jnp.float32).at[:, :out_dim].set(params["bf"])

    # Batch tiling: multiples of the f32 sublane, at most 256 rows per block.
    if batch_tile is None:
        batch_tile = min(_round_up(bs, SUBLANE), 256)
    batch_tile = _round_up(batch_tile, SUBLANE)
    bs_p = _round_up(max(bs, batch_tile), batch_tile)
    if bs_p != bs:
        u = jnp.pad(u, ((0, bs_p - bs), (0, 0)))
        logt = jnp.pad(logt, ((0, bs_p - bs), (0, 0)))   # padded rows: log t = 0
    n_blocks = bs_p // batch_tile

    # Advisory cost estimate so XLA doesn't schedule pessimistically around us.
    flops = 2 * bs_p * (input_dim * hidden
                        + n_hidden * hidden * hidden
                        + hidden * out_pad)
    transcendentals = bs_p * hidden * (n_hidden + 1)          # sigmoid per SiLU
    bytes_accessed = 4 * (u.size + logt.size
                          + params["w0x"].size + params["w0t"].size + params["b0"].size
                          + params["whh"].size + params["wht"].size + params["bh"].size
                          + wfx.size + wft.size + bf.size
                          + bs_p * out_pad)

    def full_spec(shape):
        nd = len(shape)
        return pl.BlockSpec(shape, lambda i, _nd=nd: (0,) * _nd)

    out = pl.pallas_call(
        resnet_kernel,
        out_shape=jax.ShapeDtypeStruct((bs_p, out_pad), jnp.float32),
        grid=(n_blocks,),
        in_specs=[
            pl.BlockSpec((batch_tile, input_dim), lambda i: (i, 0)),   # u
            pl.BlockSpec((batch_tile, 1), lambda i: (i, 0)),           # log t
            full_spec(params["w0x"].shape),
            full_spec(params["w0t"].shape),
            full_spec(params["b0"].shape),
            full_spec(params["whh"].shape),
            full_spec(params["wht"].shape),
            full_spec(params["bh"].shape),
            full_spec(wfx.shape),
            full_spec(wft.shape),
            full_spec(bf.shape),
        ],
        out_specs=pl.BlockSpec((batch_tile, out_pad), lambda i: (i, 0)),
        compiler_params=pltpu.CompilerParams(
            dimension_semantics=("parallel",)),
        cost_estimate=pl.CostEstimate(
            flops=int(flops),
            transcendentals=int(transcendentals),
            bytes_accessed=int(bytes_accessed)),
    )(u, logt,
      params["w0x"], params["w0t"], params["b0"],
      params["whh"], params["wht"], params["bh"],
      wfx, wft, bf)

    return out[:bs, :out_dim]


def resnet_reference(x, v, t, params):
    """Pure-JAX reference mirroring the PyTorch forward, for correctness check."""
    u = jnp.concatenate([x, v], axis=-1).astype(jnp.float32)
    logt = jnp.log(t).reshape(-1, 1).astype(jnp.float32)
    silu = lambda z: z * jax.nn.sigmoid(z)

    h0 = u @ params["w0x"] + logt * params["w0t"] + params["b0"]
    h = silu(h0)
    for i in range(params["whh"].shape[0]):
        h_new = h @ params["whh"][i] + logt * params["wht"][i] + params["bh"][i]
        h = silu(h + h_new)
    return h @ params["wfx"] + logt * params["wft"] + params["bf"]


if __name__ == "__main__":
    # small shapes consistent with the module: input_dim=2 (x and v each 1-dim),
    # index_dim=1, hidden_dim=32, n_hidden_layers=4, out_dim=2, batch=8
    batch, input_dim, index_dim = 8, 2, 1
    hidden_dim, n_hidden_layers, out_dim = 32, 4, 2

    key = jax.random.PRNGKey(0)
    kx, kv, kt, kp, kf = jax.random.split(key, 5)
    x = jax.random.normal(kx, (batch, input_dim // 2), jnp.float32)
    v = jax.random.normal(kv, (batch, input_dim - input_dim // 2), jnp.float32)
    t = jax.random.uniform(kt, (batch,), jnp.float32, 0.1, 1.0)   # positive (log)

    params = init_params(kp, input_dim, index_dim, hidden_dim, n_hidden_layers, out_dim)

    # 1) forward with the module's true (zero-init final layer) parameters
    out = jax.block_until_ready(resnet_forward(x, v, t, params))
    ref = resnet_reference(x, v, t, params)
    assert out.shape == (batch, out_dim)
    assert jnp.allclose(out, ref, atol=1e-4), "mismatch vs pure-JAX reference (zero final)"

    # 2) extra check with a non-zero final layer so the padded output path is verified
    kf1, kf2, kf3 = jax.random.split(kf, 3)
    params_nz = dict(params)
    params_nz["wfx"] = jax.random.normal(kf1, (hidden_dim, out_dim), jnp.float32) * 0.1
    params_nz["wft"] = jax.random.normal(kf2, (1, out_dim), jnp.float32) * 0.1
    params_nz["bf"] = jax.random.normal(kf3, (1, out_dim), jnp.float32) * 0.1
    out2 = jax.block_until_ready(resnet_forward(x, v, t, params_nz))
    ref2 = resnet_reference(x, v, t, params_nz)
    assert jnp.allclose(out2, ref2, atol=1e-4), "mismatch vs pure-JAX reference (nonzero final)"

    print("KERNEL_OK")
</pallas_src>

<mosaic_0001>
module attributes {stable_mosaic.version = 11 : i64} {
  func.func @resnet_kernel(%arg0: i32, %arg1: memref<8x2xf32, #tpu.memory_space<vmem>>, %arg2: memref<8x1xf32, #tpu.memory_space<vmem>>, %arg3: memref<2x32xf32, #tpu.memory_space<vmem>>, %arg4: memref<1x32xf32, #tpu.memory_space<vmem>>, %arg5: memref<1x32xf32, #tpu.memory_space<vmem>>, %arg6: memref<4x32x32xf32, #tpu.memory_space<vmem>>, %arg7: memref<4x1x32xf32, #tpu.memory_space<vmem>>, %arg8: memref<4x1x32xf32, #tpu.memory_space<vmem>>, %arg9: memref<32x128xf32, #tpu.memory_space<vmem>>, %arg10: memref<1x128xf32, #tpu.memory_space<vmem>>, %arg11: memref<1x128xf32, #tpu.memory_space<vmem>>, %arg12: memref<8x128xf32, #tpu.memory_space<vmem>>) attributes {dimension_semantics = [#tpu.dimension_semantics<parallel>], iteration_bounds = array<i64: 1>, scalar_prefetch = 0 : i64, scratch_operands = 0 : i64, tpu.core_type = #tpu.core_type<tc>, window_params = [{transform_indices = @transform_0, window_bounds = array<i64: 8, 2>}, {transform_indices = @transform_1, window_bounds = array<i64: 8, 1>}, {pipeline_mode = #tpu.pipeline_mode<synchronous>, transform_indices = @transform_2, window_bounds = array<i64: 2, 32>}, {pipeline_mode = #tpu.pipeline_mode<synchronous>, transform_indices = @transform_3, window_bounds = array<i64: 1, 32>}, {pipeline_mode = #tpu.pipeline_mode<synchronous>, transform_indices = @transform_4, window_bounds = array<i64: 1, 32>}, {pipeline_mode = #tpu.pipeline_mode<synchronous>, transform_indices = @transform_5, window_bounds = array<i64: 4, 32, 32>}, {pipeline_mode = #tpu.pipeline_mode<synchronous>, transform_indices = @transform_6, window_bounds = array<i64: 4, 1, 32>}, {pipeline_mode = #tpu.pipeline_mode<synchronous>, transform_indices = @transform_7, window_bounds = array<i64: 4, 1, 32>}, {pipeline_mode = #tpu.pipeline_mode<synchronous>, transform_indices = @transform_8, window_bounds = array<i64: 32, 128>}, {pipeline_mode = #tpu.pipeline_mode<synchronous>, transform_indices = @transform_9, window_bounds = array<i64: 1, 128>}, {pipeline_mode = #tpu.pipeline_mode<synchronous>, transform_indices = @transform_10, window_bounds = array<i64: 1, 128>}, {transform_indices = @transform_11, window_bounds = array<i64: 8, 128>}]} {
    %c0 = arith.constant 0 : index
    %c0_0 = arith.constant 0 : index
    %0 = vector.load %arg1[%c0, %c0_0] : memref<8x2xf32, #tpu.memory_space<vmem>>, vector<8x2xf32>
    %c0_1 = arith.constant 0 : index
    %c0_2 = arith.constant 0 : index
    %1 = vector.load %arg2[%c0_1, %c0_2] : memref<8x1xf32, #tpu.memory_space<vmem>>, vector<8x1xf32>
    %c0_3 = arith.constant 0 : index
    %c0_4 = arith.constant 0 : index
    %2 = vector.load %arg3[%c0_3, %c0_4] : memref<2x32xf32, #tpu.memory_space<vmem>>, vector<2x32xf32>
    %c0_5 = arith.constant 0 : index
    %c0_6 = arith.constant 0 : index
    %3 = vector.load %arg4[%c0_5, %c0_6] : memref<1x32xf32, #tpu.memory_space<vmem>>, vector<1x32xf32>
    %4 = vector.broadcast %1 : vector<8x1xf32> to vector<8x32xf32>
    %5 = vector.broadcast %3 : vector<1x32xf32> to vector<8x32xf32>
    %6 = arith.mulf %4, %5 : vector<8x32xf32>
    %c0_7 = arith.constant 0 : index
    %c0_8 = arith.constant 0 : index
    %7 = vector.load %arg5[%c0_7, %c0_8] : memref<1x32xf32, #tpu.memory_space<vmem>>, vector<1x32xf32>
    %8 = vector.broadcast %7 : vector<1x32xf32> to vector<8x32xf32>
    %9 = arith.addf %6, %8 : vector<8x32xf32>
    %10 = vector.shape_cast %1 : vector<8x1xf32> to vector<1x8x1xf32>
    %c0_9 = arith.constant 0 : index
    %c0_10 = arith.constant 0 : index
    %c0_11 = arith.constant 0 : index
    %11 = vector.load %arg7[%c0_9, %c0_10, %c0_11] : memref<4x1x32xf32, #tpu.memory_space<vmem>>, vector<4x1x32xf32>
    %12 = vector.broadcast %10 : vector<1x8x1xf32> to vector<4x8x32xf32>
    %13 = vector.broadcast %11 : vector<4x1x32xf32> to vector<4x8x32xf32>
    %14 = arith.mulf %12, %13 : vector<4x8x32xf32>
    %c0_12 = arith.constant 0 : index
    %c0_13 = arith.constant 0 : index
    %c0_14 = arith.constant 0 : index
    %15 = vector.load %arg8[%c0_12, %c0_13, %c0_14] : memref<4x1x32xf32, #tpu.memory_space<vmem>>, vector<4x1x32xf32>
    %16 = vector.broadcast %15 : vector<4x1x32xf32> to vector<4x8x32xf32>
    %17 = arith.addf %14, %16 : vector<4x8x32xf32>
    %c0_15 = arith.constant 0 : index
    %c0_16 = arith.constant 0 : index
    %18 = vector.load %arg10[%c0_15, %c0_16] : memref<1x128xf32, #tpu.memory_space<vmem>>, vector<1x128xf32>
    %19 = vector.broadcast %1 : vector<8x1xf32> to vector<8x128xf32>
    %20 = vector.broadcast %18 : vector<1x128xf32> to vector<8x128xf32>
    %21 = arith.mulf %19, %20 : vector<8x128xf32>
    %c0_17 = arith.constant 0 : index
    %c0_18 = arith.constant 0 : index
    %22 = vector.load %arg11[%c0_17, %c0_18] : memref<1x128xf32, #tpu.memory_space<vmem>>, vector<1x128xf32>
    %23 = vector.broadcast %22 : vector<1x128xf32> to vector<8x128xf32>
    %24 = arith.addf %21, %23 : vector<8x128xf32>
    %25 = vector.extract_strided_slice %0 {offsets = [0, 0], sizes = [8, 1], strides = [1, 1]} : vector<8x2xf32> to vector<8x1xf32>
    %26 = vector.extract_strided_slice %2 {offsets = [0, 0], sizes = [1, 32], strides = [1, 1]} : vector<2x32xf32> to vector<1x32xf32>
    %27 = vector.broadcast %25 : vector<8x1xf32> to vector<8x32xf32>
    %28 = vector.broadcast %26 : vector<1x32xf32> to vector<8x32xf32>
    %29 = arith.mulf %27, %28 : vector<8x32xf32>
    %30 = arith.addf %9, %29 : vector<8x32xf32>
    %31 = vector.extract_strided_slice %0 {offsets = [0, 1], sizes = [8, 1], strides = [1, 1]} : vector<8x2xf32> to vector<8x1xf32>
    %32 = vector.extract_strided_slice %2 {offsets = [1, 0], sizes = [1, 32], strides = [1, 1]} : vector<2x32xf32> to vector<1x32xf32>
    %33 = vector.broadcast %31 : vector<8x1xf32> to vector<8x32xf32>
    %34 = vector.broadcast %32 : vector<1x32xf32> to vector<8x32xf32>
    %35 = arith.mulf %33, %34 : vector<8x32xf32>
    %36 = arith.addf %30, %35 : vector<8x32xf32>
    %37 = arith.negf %36 : vector<8x32xf32>
    %38 = math.exp %37 : vector<8x32xf32>
    %cst = arith.constant 1.000000e+00 : f32
    %39 = vector.broadcast %cst : f32 to vector<8x32xf32>
    %40 = arith.addf %39, %38 : vector<8x32xf32>
    %41 = arith.divf %39, %40 : vector<8x32xf32>
    %42 = arith.mulf %36, %41 : vector<8x32xf32>
    %c0_19 = arith.constant 0 : index
    %c0_20 = arith.constant 0 : index
    %c0_21 = arith.constant 0 : index
    %43 = vector.load %arg6[%c0_19, %c0_20, %c0_21] : memref<4x32x32xf32, #tpu.memory_space<vmem>>, vector<1x32x32xf32>
    %44 = vector.shape_cast %43 : vector<1x32x32xf32> to vector<32x32xf32>
    %cst_22 = arith.constant dense<0.000000e+00> : vector<8x32xf32>
    %45 = tpu.matmul %42, %44, %cst_22 {dimension_numbers = #tpu.dot_dimension_numbers<[1], [0], [0], [1], [0, 0, 1, 1], [], []>} : vector<8x32xf32>, vector<32x32xf32>, vector<8x32xf32> -> vector<8x32xf32>
    %46 = vector.extract_strided_slice %17 {offsets = [0, 0, 0], sizes = [1, 8, 32], strides = [1, 1, 1]} : vector<4x8x32xf32> to vector<1x8x32xf32>
    %47 = vector.shape_cast %46 : vector<1x8x32xf32> to vector<8x32xf32>
    %48 = arith.addf %45, %47 : vector<8x32xf32>
    %49 = arith.addf %42, %48 : vector<8x32xf32>
    %50 = arith.negf %49 : vector<8x32xf32>
    %51 = math.exp %50 : vector<8x32xf32>
    %cst_23 = arith.constant 1.000000e+00 : f32
    %52 = vector.broadcast %cst_23 : f32 to vector<8x32xf32>
    %53 = arith.addf %52, %51 : vector<8x32xf32>
    %54 = arith.divf %52, %53 : vector<8x32xf32>
    %55 = arith.mulf %49, %54 : vector<8x32xf32>
    %c1 = arith.constant 1 : index
    %c0_24 = arith.constant 0 : index
    %c0_25 = arith.constant 0 : index
    %56 = vector.load %arg6[%c1, %c0_24, %c0_25] : memref<4x32x32xf32, #tpu.memory_space<vmem>>, vector<1x32x32xf32>
    %57 = vector.shape_cast %56 : vector<1x32x32xf32> to vector<32x32xf32>
    %cst_26 = arith.constant dense<0.000000e+00> : vector<8x32xf32>
    %58 = tpu.matmul %55, %57, %cst_26 {dimension_numbers = #tpu.dot_dimension_numbers<[1], [0], [0], [1], [0, 0, 1, 1], [], []>} : vector<8x32xf32>, vector<32x32xf32>, vector<8x32xf32> -> vector<8x32xf32>
    %59 = vector.extract_strided_slice %17 {offsets = [1, 0, 0], sizes = [1, 8, 32], strides = [1, 1, 1]} : vector<4x8x32xf32> to vector<1x8x32xf32>
    %60 = vector.shape_cast %59 : vector<1x8x32xf32> to vector<8x32xf32>
    %61 = arith.addf %58, %60 : vector<8x32xf32>
    %62 = arith.addf %55, %61 : vector<8x32xf32>
    %63 = arith.negf %62 : vector<8x32xf32>
    %64 = math.exp %63 : vector<8x32xf32>
    %cst_27 = arith.constant 1.000000e+00 : f32
    %65 = vector.broadcast %cst_27 : f32 to vector<8x32xf32>
    %66 = arith.addf %65, %64 : vector<8x32xf32>
    %67 = arith.divf %65, %66 : vector<8x32xf32>
    %68 = arith.mulf %62, %67 : vector<8x32xf32>
    %c2 = arith.constant 2 : index
    %c0_28 = arith.constant 0 : index
    %c0_29 = arith.constant 0 : index
    %69 = vector.load %arg6[%c2, %c0_28, %c0_29] : memref<4x32x32xf32, #tpu.memory_space<vmem>>, vector<1x32x32xf32>
    %70 = vector.shape_cast %69 : vector<1x32x32xf32> to vector<32x32xf32>
    %cst_30 = arith.constant dense<0.000000e+00> : vector<8x32xf32>
    %71 = tpu.matmul %68, %70, %cst_30 {dimension_numbers = #tpu.dot_dimension_numbers<[1], [0], [0], [1], [0, 0, 1, 1], [], []>} : vector<8x32xf32>, vector<32x32xf32>, vector<8x32xf32> -> vector<8x32xf32>
    %72 = vector.extract_strided_slice %17 {offsets = [2, 0, 0], sizes = [1, 8, 32], strides = [1, 1, 1]} : vector<4x8x32xf32> to vector<1x8x32xf32>
    %73 = vector.shape_cast %72 : vector<1x8x32xf32> to vector<8x32xf32>
    %74 = arith.addf %71, %73 : vector<8x32xf32>
    %75 = arith.addf %68, %74 : vector<8x32xf32>
    %76 = arith.negf %75 : vector<8x32xf32>
    %77 = math.exp %76 : vector<8x32xf32>
    %cst_31 = arith.constant 1.000000e+00 : f32
    %78 = vector.broadcast %cst_31 : f32 to vector<8x32xf32>
    %79 = arith.addf %78, %77 : vector<8x32xf32>
    %80 = arith.divf %78, %79 : vector<8x32xf32>
    %81 = arith.mulf %75, %80 : vector<8x32xf32>
    %c3 = arith.constant 3 : index
    %c0_32 = arith.constant 0 : index
    %c0_33 = arith.constant 0 : index
    %82 = vector.load %arg6[%c3, %c0_32, %c0_33] : memref<4x32x32xf32, #tpu.memory_space<vmem>>, vector<1x32x32xf32>
    %83 = vector.shape_cast %82 : vector<1x32x32xf32> to vector<32x32xf32>
    %cst_34 = arith.constant dense<0.000000e+00> : vector<8x32xf32>
    %84 = tpu.matmul %81, %83, %cst_34 {dimension_numbers = #tpu.dot_dimension_numbers<[1], [0], [0], [1], [0, 0, 1, 1], [], []>} : vector<8x32xf32>, vector<32x32xf32>, vector<8x32xf32> -> vector<8x32xf32>
    %85 = vector.extract_strided_slice %17 {offsets = [3, 0, 0], sizes = [1, 8, 32], strides = [1, 1, 1]} : vector<4x8x32xf32> to vector<1x8x32xf32>
    %86 = vector.shape_cast %85 : vector<1x8x32xf32> to vector<8x32xf32>
    %87 = arith.addf %84, %86 : vector<8x32xf32>
    %88 = arith.addf %81, %87 : vector<8x32xf32>
    %89 = arith.negf %88 : vector<8x32xf32>
    %90 = math.exp %89 : vector<8x32xf32>
    %cst_35 = arith.constant 1.000000e+00 : f32
    %91 = vector.broadcast %cst_35 : f32 to vector<8x32xf32>
    %92 = arith.addf %91, %90 : vector<8x32xf32>
    %93 = arith.divf %91, %92 : vector<8x32xf32>
    %94 = arith.mulf %88, %93 : vector<8x32xf32>
    %c0_36 = arith.constant 0 : index
    %c0_37 = arith.constant 0 : index
    %95 = vector.load %arg9[%c0_36, %c0_37] : memref<32x128xf32, #tpu.memory_space<vmem>>, vector<32x128xf32>
    %cst_38 = arith.constant dense<0.000000e+00> : vector<8x128xf32>
    %96 = tpu.matmul %94, %95, %cst_38 {dimension_numbers = #tpu.dot_dimension_numbers<[1], [0], [0], [1], [0, 0, 1, 1], [], []>} : vector<8x32xf32>, vector<32x128xf32>, vector<8x128xf32> -> vector<8x128xf32>
    %97 = arith.addf %96, %24 : vector<8x128xf32>
    %c0_39 = arith.constant 0 : index
    %c0_40 = arith.constant 0 : index
    %98 = vector.load %arg12[%c0_39, %c0_40] : memref<8x128xf32, #tpu.memory_space<vmem>>, vector<8x128xf32>
    tpu.vector_store %arg12[%c0_39, %c0_40], %97 {strides = array<i32>} : memref<8x128xf32, #tpu.memory_space<vmem>>, vector<8x128xf32>,
    return
  }
  func.func @transform_0(%arg0: i32) -> (i32, i32) {
    %c0_i32 = arith.constant 0 : i32
    %c0_i32_0 = arith.constant 0 : i32
    return %arg0, %c0_i32 : i32, i32
  }
  func.func @transform_1(%arg0: i32) -> (i32, i32) {
    %c0_i32 = arith.constant 0 : i32
    %c0_i32_0 = arith.constant 0 : i32
    return %arg0, %c0_i32 : i32, i32
  }
  func.func @transform_2(%arg0: i32) -> (i32, i32) {
    %c0_i32 = arith.constant 0 : i32
    %c0_i32_0 = arith.constant 0 : i32
    %c0_i32_1 = arith.constant 0 : i32
    return %c0_i32, %c0_i32_0 : i32, i32
  }
  func.func @transform_3(%arg0: i32) -> (i32, i32) {
    %c0_i32 = arith.constant 0 : i32
    %c0_i32_0 = arith.constant 0 : i32
    %c0_i32_1 = arith.constant 0 : i32
    return %c0_i32, %c0_i32_0 : i32, i32
  }
  func.func @transform_4(%arg0: i32) -> (i32, i32) {
    %c0_i32 = arith.constant 0 : i32
    %c0_i32_0 = arith.constant 0 : i32
    %c0_i32_1 = arith.constant 0 : i32
    return %c0_i32, %c0_i32_0 : i32, i32
  }
  func.func @transform_5(%arg0: i32) -> (i32, i32, i32) {
    %c0_i32 = arith.constant 0 : i32
    %c0_i32_0 = arith.constant 0 : i32
    %c0_i32_1 = arith.constant 0 : i32
    %c0_i32_2 = arith.constant 0 : i32
    return %c0_i32, %c0_i32_0, %c0_i32_1 : i32, i32, i32
  }
  func.func @transform_6(%arg0: i32) -> (i32, i32, i32) {
    %c0_i32 = arith.constant 0 : i32
    %c0_i32_0 = arith.constant 0 : i32
    %c0_i32_1 = arith.constant 0 : i32
    %c0_i32_2 = arith.constant 0 : i32
    return %c0_i32, %c0_i32_0, %c0_i32_1 : i32, i32, i32
  }
  func.func @transform_7(%arg0: i32) -> (i32, i32, i32) {
    %c0_i32 = arith.constant 0 : i32
    %c0_i32_0 = arith.constant 0 : i32
    %c0_i32_1 = arith.constant 0 : i32
    %c0_i32_2 = arith.constant 0 : i32
    return %c0_i32, %c0_i32_0, %c0_i32_1 : i32, i32, i32
  }
  func.func @transform_8(%arg0: i32) -> (i32, i32) {
    %c0_i32 = arith.constant 0 : i32
    %c0_i32_0 = arith.constant 0 : i32
    %c0_i32_1 = arith.constant 0 : i32
    return %c0_i32, %c0_i32_0 : i32, i32
  }
  func.func @transform_9(%arg0: i32) -> (i32, i32) {
    %c0_i32 = arith.constant 0 : i32
    %c0_i32_0 = arith.constant 0 : i32
    %c0_i32_1 = arith.constant 0 : i32
    return %c0_i32, %c0_i32_0 : i32, i32
  }
  func.func @transform_10(%arg0: i32) -> (i32, i32) {
    %c0_i32 = arith.constant 0 : i32
    %c0_i32_0 = arith.constant 0 : i32
    %c0_i32_1 = arith.constant 0 : i32
    return %c0_i32, %c0_i32_0 : i32, i32
  }
  func.func @transform_11(%arg0: i32) -> (i32, i32) {
    %c0_i32 = arith.constant 0 : i32
    %c0_i32_0 = arith.constant 0 : i32
    return %arg0, %c0_i32 : i32, i32
  }
}

</mosaic_0001>

<llo_original>
// kernel: tpu_custom_call.1
$region0: #{tpu_custom_call.1}
  #allocation0 [shape = 'u32[]', space=smem, size = 0x4, offset = 0x4, fixed_abs, tag = 'smem constant byte address 0x4 - core index']
  #allocation1 [shape = 'u32[144,128]{1,0:T(1,128)}', space=vmem, size = 0x12000, scoped, tag = 'internal scratch']
  %s0 = inlined_call_operand.vmem [shape: f32[8,2], index: 0, kind: input, shape index: {}]
  %s1 = inlined_call_operand.vmem [shape: f32[8,1], index: 1, kind: input, shape index: {}]
  %s2 = inlined_call_operand.vmem [shape: f32[2,32], index: 2, kind: input, shape index: {}]
  %s3 = inlined_call_operand.vmem [shape: f32[1,32], index: 3, kind: input, shape index: {}]
  %s4 = inlined_call_operand.vmem [shape: f32[1,32], index: 4, kind: input, shape index: {}]
  %s5 = inlined_call_operand.hbm [shape: f32[4,32,32], index: 5, kind: input, shape index: {}]
  %s6 = inlined_call_operand.vmem [shape: f32[4,1,32], index: 6, kind: input, shape index: {}]
  %s7 = inlined_call_operand.vmem [shape: f32[4,1,32], index: 7, kind: input, shape index: {}]
  %s8 = inlined_call_operand.vmem [shape: f32[32,128], index: 8, kind: input, shape index: {}]
  %s9 = inlined_call_operand.vmem [shape: f32[1,128], index: 9, kind: input, shape index: {}]
  %s10 = inlined_call_operand.vmem [shape: f32[1,128], index: 10, kind: input, shape index: {}]
  %s11 = inlined_call_operand.hbm [shape: f32[8,128], index: 11, kind: output, shape index: {}]
  %s12 = sld [smem:[#allocation0]]
  $region58: #{tpu_custom_call.1} parent=0
    _
  %s14 = ssub.s32 1, %s12
  %s15 = scalar_select 0, %s14, %s12
  $region1: #{tpu_custom_call.1} parent=0
    #allocation2 [shape = 'u8[65536]{0}', space=vmem, size = 0x10000, scoped, tag = 'input window, operand 5, single buffered']
    #allocation3 [shape = 's32[1]{0}', space=sflag, size = 0x4, scoped, tag = 'scoped memory for tpu_custom_call.1']
    #allocation4 [shape = 's32[1]{0}', space=sflag, size = 0x4, scoped, tag = 'scoped memory for tpu_custom_call.1']
    #allocation5 [shape = 'u8[4096]{0}', space=vmem, size = 0x1000, scoped, tag = 'output window, operand 0, single buffered']
    %16 = vsyncpa [#allocation3], 0
    %17 = vsyncpa [#allocation4], 0
    // Predicated region
    $region2: #{tpu_custom_call.1} parent=1 // pred_check
      _
    $region3: #{tpu_custom_call.1} parent=1 // pred_check_branch
      %19 = sbr.rel (0) target = $region5
    $region4: #{tpu_custom_call.1} parent=1 // pred_region
      _
    $region5: #{tpu_custom_call.1} parent=1 // pred_fallthru
      _
    // Predicated region
    $region6: #{tpu_custom_call.1} parent=1 // pred_check
      _
    $region7: #{tpu_custom_call.1} parent=1 // pred_check_branch
      %21 = sbr.rel (0) target = $region9
    $region8: #{tpu_custom_call.1} parent=1 // pred_region
      _
    $region9: #{tpu_custom_call.1} parent=1 // pred_fallthru
      _
    // Predicated region
    $region10: #{tpu_custom_call.1} parent=1 // pred_check
      _
    $region11: #{tpu_custom_call.1} parent=1 // pred_check_branch
      %23 = sbr.rel (0) target = $region13
    $region12: #{tpu_custom_call.1} parent=1 // pred_region
      _
    $region13: #{tpu_custom_call.1} parent=1 // pred_fallthru
      _
    // Predicated region
    $region14: #{tpu_custom_call.1} parent=1 // pred_check
      _
    $region15: #{tpu_custom_call.1} parent=1 // pred_check_branch
      %25 = sbr.rel (0) target = $region17
    $region16: #{tpu_custom_call.1} parent=1 // pred_region
      _
    $region17: #{tpu_custom_call.1} parent=1 // pred_fallthru
      _
    // Predicated region
    $region18: #{tpu_custom_call.1} parent=1 // pred_check
      _
    $region19: #{tpu_custom_call.1} parent=1 // pred_check_branch
      %27 = sbr.rel (0) target = $region21
    $region20: #{tpu_custom_call.1} parent=1 // pred_region
      _
    $region21: #{tpu_custom_call.1} parent=1 // pred_fallthru
      _
    // Predicated region
    $region22: #{tpu_custom_call.1} parent=1 // pred_check
      _
    $region23: #{tpu_custom_call.1} parent=1 // pred_check_branch
      %29 = sbr.rel (0) target = $region25
    $region24: #{tpu_custom_call.1} parent=1 // pred_region
      %s31 = ssub.s32 2048, 2048
      %32 = vsyncadd [#allocation3], %s31
      %s33 = sshll.u32 [#allocation2], 4
      %s34 = int_to_ptr.vmem [resolvable:$true] %s33
      %39 = dma.hbm_to_vmem [thread:$0]  %s5, 2048, %s34, [#allocation3], 128, 128, 8
    $region25: #{tpu_custom_call.1} parent=1 // pred_fallthru
      _
    // Predicated region
    $region26: #{tpu_custom_call.1} parent=1 // pred_check
      _
    $region27: #{tpu_custom_call.1} parent=1 // pred_check_branch
      %41 = sbr.rel (0) target = $region29
    $region28: #{tpu_custom_call.1} parent=1 // pred_region
      _
    $region29: #{tpu_custom_call.1} parent=1 // pred_fallthru
      _
    // Predicated region
    $region30: #{tpu_custom_call.1} parent=1 // pred_check
      _
    $region31: #{tpu_custom_call.1} parent=1 // pred_check_branch
      %43 = sbr.rel (0) target = $region33
    $region32: #{tpu_custom_call.1} parent=1 // pred_region
      _
    $region33: #{tpu_custom_call.1} parent=1 // pred_fallthru
      _
    // Predicated region
    $region34: #{tpu_custom_call.1} parent=1 // pred_check
      _
    $region35: #{tpu_custom_call.1} parent=1 // pred_check_branch
      %45 = sbr.rel (0) target = $region37
    $region36: #{tpu_custom_call.1} parent=1 // pred_region
      _
    $region37: #{tpu_custom_call.1} parent=1 // pred_fallthru
      _
    // Predicated region
    $region38: #{tpu_custom_call.1} parent=1 // pred_check
      _
    $region39: #{tpu_custom_call.1} parent=1 // pred_check_branch
      %47 = sbr.rel (0) target = $region41
    $region40: #{tpu_custom_call.1} parent=1 // pred_region
      _
    $region41: #{tpu_custom_call.1} parent=1 // pred_fallthru
      _
    // Predicated region
    $region42: #{tpu_custom_call.1} parent=1 // pred_check
      _
    $region43: #{tpu_custom_call.1} parent=1 // pred_check_branch
      %49 = sbr.rel (0) target = $region45
    $region44: #{tpu_custom_call.1} parent=1 // pred_region
      _
    $region45: #{tpu_custom_call.1} parent=1 // pred_fallthru
      _
    // Predicated region
    $region46: #{tpu_custom_call.1} parent=1 // pred_check
      _
    $region47: #{tpu_custom_call.1} parent=1 // pred_check_branch
      %51 = sbr.rel (0) target = $region49
    $region48: #{tpu_custom_call.1} parent=1 // pred_region
      %52 = dma.done [#allocation3], 2048
    $region49: #{tpu_custom_call.1} parent=1 // pred_fallthru
      _
    %v53 = vld [vmem:[%s0] sm:$0xff]
    %v54 = vld [vmem:[%s1] sm:$0xff]
    %v55 = vld [vmem:[%s2] sm:$0x3]
    %v56 = vld [vmem:[%s3] sm:$0x1]
    %58 = vset.pattern.permute.xlu0 0
    %59 = vperm.xlu0 %58, %v54
    %v60 = vpop.permute.xlu0 %59
    %v63 = vlaneseq
    %v64 = vshrl.u32 %v63, 7
    %v65 = vsub.s32 0, %v64
    %v66 = vrot.slane %v56, %v65
    %v68 = vmul.f32 %v60, %v66
    %v69 = vld [vmem:[%s4] sm:$0x1]
    %v71 = vlaneseq
    %v72 = vshrl.u32 %v71, 7
    %v73 = vsub.s32 0, %v72
    %v74 = vrot.slane %v69, %v73
    %v76 = vadd.f32 %v68, %v74
    %v77 = vld [vmem:[%s6] sm:$0x1]
    %v78 = vld [vmem:[%s6 + $0x1] sm:$0x1]
    %v79 = vld [vmem:[%s6 + $0x2] sm:$0x1]
    %v80 = vld [vmem:[%s6 + $0x3] sm:$0x1]
    %v85 = vlaneseq
    %v86 = vshrl.u32 %v85, 7
    %v87 = vsub.s32 0, %v86
    %v88 = vrot.slane %v77, %v87
    %v89 = vlaneseq
    %v90 = vshrl.u32 %v89, 7
    %v91 = vsub.s32 0, %v90
    %v92 = vrot.slane %v78, %v91
    %v93 = vlaneseq
    %v94 = vshrl.u32 %v93, 7
    %v95 = vsub.s32 0, %v94
    %v96 = vrot.slane %v79, %v95
    %v97 = vlaneseq
    %v98 = vshrl.u32 %v97, 7
    %v99 = vsub.s32 0, %v98
    %v100 = vrot.slane %v80, %v99
    %v105 = vmul.f32 %v60, %v88
    %v106 = vmul.f32 %v60, %v92
    %v107 = vmul.f32 %v60, %v96
    %v108 = vmul.f32 %v60, %v100
    %v109 = vld [vmem:[%s7] sm:$0x1]
    %v110 = vld [vmem:[%s7 + $0x1] sm:$0x1]
    %v111 = vld [vmem:[%s7 + $0x2] sm:$0x1]
    %v112 = vld [vmem:[%s7 + $0x3] sm:$0x1]
    %v117 = vlaneseq
    %v118 = vshrl.u32 %v117, 7
    %v119 = vsub.s32 0, %v118
    %v120 = vrot.slane %v109, %v119
    %v121 = vlaneseq
    %v122 = vshrl.u32 %v121, 7
    %v123 = vsub.s32 0, %v122
    %v124 = vrot.slane %v110, %v123
    %v125 = vlaneseq
    %v126 = vshrl.u32 %v125, 7
    %v127 = vsub.s32 0, %v126
    %v128 = vrot.slane %v111, %v127
    %v129 = vlaneseq
    %v130 = vshrl.u32 %v129, 7
    %v131 = vsub.s32 0, %v130
    %v132 = vrot.slane %v112, %v131
    %v137 = vadd.f32 %v105, %v120
    %v138 = vadd.f32 %v106, %v124
    %v139 = vadd.f32 %v107, %v128
    %v140 = vadd.f32 %v108, %v132
    %v141 = vld [vmem:[%s9] sm:$0x1]
    %v143 = vlaneseq
    %v144 = vshrl.u32 %v143, 7
    %v145 = vsub.s32 0, %v144
    %v146 = vrot.slane %v141, %v145
    %v148 = vmul.f32 %v60, %v146
    %v149 = vld [vmem:[%s10] sm:$0x1]
    %v151 = vlaneseq
    %v152 = vshrl.u32 %v151, 7
    %v153 = vsub.s32 0, %v152
    %v154 = vrot.slane %v149, %v153
    %v156 = vadd.f32 %v148, %v154
    %158 = vset.pattern.permute.xlu0 0
    %159 = vperm.xlu0 %158, %v53
    %v160 = vpop.permute.xlu0 %159
    %v162 = vlaneseq
    %v163 = vshrl.u32 %v162, 7
    %v164 = vsub.s32 0, %v163
    %v165 = vrot.slane %v55, %v164
    %v166 = vmul.f32 %v160, %v165
    %v167 = vadd.f32 %v76, %v166
    %168 = vset.pattern.permute.xlu0 1
    %169 = vperm.xlu0 %168, %v53
    %v170 = vpop.permute.xlu0 %169
    %v172 = vlaneseq
    %v173 = vshrl.u32 %v172, 7
    %v174 = vsub.s32 1, %v173
    %v175 = vrot.slane %v55, %v174
    %v176 = vmul.f32 %v170, %v175
    %v177 = vadd.f32 %v167, %v176
    %v178 = vxor.u32 %v177, 2147483648
    %v179 = vmul.f32 %v178, 1.442695
    %v180 = vpow.pop %v179
    %v181 = vadd.f32 %v180, 1.0
    %v182 = vrcp.pop %v181
    %v183 = vmul.f32 1.0, %v182
    %v184 = vmul.f32 %v177, %v183
    %v185 = vld [vmem:[#allocation2] sm:$0xff]
    %v186 = vld [vmem:[#allocation2 + $0x8] sm:$0xff]
    %v187 = vld [vmem:[#allocation2 + $0x10] sm:$0xff]
    %v188 = vld [vmem:[#allocation2 + $0x18] sm:$0xff]
    %vm189 = vcmask 261120
    %v191 = vsel %vm189, %v184, 0
    %193 = vmatprep.subr.mxu0 0.0
    %194 = vmatpush1.msra.mxu0 %v185
    %195 = vmatprep.subr.mxu0 0.0
    %196 = vmatpush1.msra.mxu0 %v186
    %197 = vmatprep.subr.mxu0 0.0
    %198 = vmatpush1.msra.mxu0 %v187
    %199 = vmatprep.subr.mxu0 0.0
    %200 = vmatpush1.msra.mxu0 %v188
    %201 = vmatprep.subr.mxu0 0.0
    %202 = vmatpush1.msra.mxu0 0.0
    %203 = vmatprep.subr.mxu0 0.0
    %204 = vmatpush1.msra.mxu0 0.0
    %205 = vmatprep.subr.mxu0 0.0
    %206 = vmatpush1.msra.mxu0 0.0
    %207 = vmatprep.subr.mxu0 0.0
    %208 = vmatpush1.msra.mxu0 0.0
    %209 = vmatprep.subr.mxu0 0.0
    %210 = vmatpush1.msra.mxu0 0.0
    %211 = vmatprep.subr.mxu0 0.0
    %212 = vmatpush1.msra.mxu0 0.0
    %213 = vmatprep.subr.mxu0 0.0
    %214 = vmatpush1.msra.mxu0 0.0
    %215 = vmatprep.subr.mxu0 0.0
    %216 = vmatpush1.msra.mxu0 0.0
    %217 = vmatprep.subr.mxu0 0.0
    %218 = vmatpush1.msra.mxu0 0.0
    %219 = vmatprep.subr.mxu0 0.0
    %220 = vmatpush1.msra.mxu0 0.0
    %221 = vmatprep.subr.mxu0 0.0
    %222 = vmatpush1.msra.mxu0 0.0
    %223 = vmatprep.subr.mxu0 0.0
    %224 = vmatpush1.msra.mxu0 0.0
    %225 = vmatprep.subr.mxu0 0.0
    %226 = vmatpush1.msra.mxu0 0.0
    %227 = vmatprep.subr.mxu0 0.0
    %228 = vmatpush1.msra.mxu0 0.0
    %229 = vmatprep.subr.mxu0 0.0
    %230 = vmatpush1.msra.mxu0 0.0
    %231 = vmatprep.subr.mxu0 0.0
    %232 = vmatpush1.msra.mxu0 0.0
    %233 = vmatprep.subr.mxu0 0.0
    %234 = vmatpush1.msra.mxu0 0.0
    %235 = vmatprep.subr.mxu0 0.0
    %236 = vmatpush1.msra.mxu0 0.0
    %237 = vmatprep.subr.mxu0 0.0
    %238 = vmatpush1.msra.mxu0 0.0
    %239 = vmatprep.subr.mxu0 0.0
    %240 = vmatpush1.msra.mxu0 0.0
    %241 = vmatprep.subr.mxu0 0.0
    %242 = vmatpush1.msra.mxu0 0.0
    %243 = vmatprep.subr.mxu0 0.0
    %244 = vmatpush1.msra.mxu0 0.0
    %245 = vmatprep.subr.mxu0 0.0
    %246 = vmatpush1.msra.mxu0 0.0
    %247 = vmatprep.subr.mxu0 0.0
    %248 = vmatpush1.msra.mxu0 0.0
    %249 = vmatprep.subr.mxu0 0.0
    %250 = vmatpush1.msra.mxu0 0.0
    %251 = vmatprep.subr.mxu0 0.0
    %252 = vmatpush1.msra.mxu0 0.0
    %253 = vmatprep.subr.mxu0 0.0
    %254 = vmatpush1.msra.mxu0 0.0
    %255 = vmatprep.subr.mxu0 0.0
    %256 = vmatpush1.msra.mxu0 0.0
    %257 = vmatprep.mubr.f32.mxu0 0.0
    %258 = vmatmul.mubr.f32.gmra.mrb[0].mxu0 %v191
    %v259 = vpop.f32.mrb[0].mxu0
    %v260 = vadd.f32 %v137, %v259
    %v261 = vpop.f32.mrb[0].mxu0
    %262 = vdwg.mxu0
    %v263 = vadd.f32 %v184, %v260
    %v264 = vxor.u32 %v263, 2147483648
    %v265 = vmul.f32 %v264, 1.442695
    %v266 = vpow.pop %v265
    %v267 = vadd.f32 %v266, 1.0
    %v268 = vrcp.pop %v267
    %v269 = vmul.f32 1.0, %v268
    %v270 = vmul.f32 %v263, %v269
    %s271 = scalar_lea.vmem [#allocation2], 32
    %v272 = vld [vmem:[%s271] sm:$0xff]
    %v273 = vld [vmem:[%s271 + $0x8] sm:$0xff]
    %v274 = vld [vmem:[%s271 + $0x10] sm:$0xff]
    %v275 = vld [vmem:[%s271 + $0x18] sm:$0xff]
    %v277 = vsel %vm189, %v270, 0
    %279 = vmatprep.subr.mxu0 0.0
    %280 = vmatpush1.msra.mxu0 %v272
    %281 = vmatprep.subr.mxu0 0.0
    %282 = vmatpush1.msra.mxu0 %v273
    %283 = vmatprep.subr.mxu0 0.0
    %284 = vmatpush1.msra.mxu0 %v274
    %285 = vmatprep.subr.mxu0 0.0
    %286 = vmatpush1.msra.mxu0 %v275
    %287 = vmatprep.subr.mxu0 0.0
    %288 = vmatpush1.msra.mxu0 0.0
    %289 = vmatprep.subr.mxu0 0.0
    %290 = vmatpush1.msra.mxu0 0.0
    %291 = vmatprep.subr.mxu0 0.0
    %292 = vmatpush1.msra.mxu0 0.0
    %293 = vmatprep.subr.mxu0 0.0
    %294 = vmatpush1.msra.mxu0 0.0
    %295 = vmatprep.subr.mxu0 0.0
    %296 = vmatpush1.msra.mxu0 0.0
    %297 = vmatprep.subr.mxu0 0.0
    %298 = vmatpush1.msra.mxu0 0.0
    %299 = vmatprep.subr.mxu0 0.0
    %300 = vmatpush1.msra.mxu0 0.0
    %301 = vmatprep.subr.mxu0 0.0
    %302 = vmatpush1.msra.mxu0 0.0
    %303 = vmatprep.subr.mxu0 0.0
    %304 = vmatpush1.msra.mxu0 0.0
    %305 = vmatprep.subr.mxu0 0.0
    %306 = vmatpush1.msra.mxu0 0.0
    %307 = vmatprep.subr.mxu0 0.0
    %308 = vmatpush1.msra.mxu0 0.0
    %309 = vmatprep.subr.mxu0 0.0
    %310 = vmatpush1.msra.mxu0 0.0
    %311 = vmatprep.subr.mxu0 0.0
    %312 = vmatpush1.msra.mxu0 0.0
    %313 = vmatprep.subr.mxu0 0.0
    %314 = vmatpush1.msra.mxu0 0.0
    %315 = vmatprep.subr.mxu0 0.0
    %316 = vmatpush1.msra.mxu0 0.0
    %317 = vmatprep.subr.mxu0 0.0
    %318 = vmatpush1.msra.mxu0 0.0
    %319 = vmatprep.subr.mxu0 0.0
    %320 = vmatpush1.msra.mxu0 0.0
    %321 = vmatprep.subr.mxu0 0.0
    %322 = vmatpush1.msra.mxu0 0.0
    %323 = vmatprep.subr.mxu0 0.0
    %324 = vmatpush1.msra.mxu0 0.0
    %325 = vmatprep.subr.mxu0 0.0
    %326 = vmatpush1.msra.mxu0 0.0
    %327 = vmatprep.subr.mxu0 0.0
    %328 = vmatpush1.msra.mxu0 0.0
    %329 = vmatprep.subr.mxu0 0.0
    %330 = vmatpush1.msra.mxu0 0.0
    %331 = vmatprep.subr.mxu0 0.0
    %332 = vmatpush1.msra.mxu0 0.0
    %333 = vmatprep.subr.mxu0 0.0
    %334 = vmatpush1.msra.mxu0 0.0
    %335 = vmatprep.subr.mxu0 0.0
    %336 = vmatpush1.msra.mxu0 0.0
    %337 = vmatprep.subr.mxu0 0.0
    %338 = vmatpush1.msra.mxu0 0.0
    %339 = vmatprep.subr.mxu0 0.0
    %340 = vmatpush1.msra.mxu0 0.0
    %341 = vmatprep.subr.mxu0 0.0
    %342 = vmatpush1.msra.mxu0 0.0
    %343 = vmatprep.mubr.f32.mxu0 0.0
    %344 = vmatmul.mubr.f32.gmra.mrb[0].mxu0 %v277
    %v345 = vpop.f32.mrb[0].mxu0
    %v346 = vadd.f32 %v138, %v345
    %v347 = vpop.f32.mrb[0].mxu0
    %348 = vdwg.mxu0
    %v349 = vadd.f32 %v270, %v346
    %v350 = vxor.u32 %v349, 2147483648
    %v351 = vmul.f32 %v350, 1.442695
    %v352 = vpow.pop %v351
    %v353 = vadd.f32 %v352, 1.0
    %v354 = vrcp.pop %v353
    %v355 = vmul.f32 1.0, %v354
    %v356 = vmul.f32 %v349, %v355
    %s357 = scalar_lea.vmem [#allocation2], 64
    %v358 = vld [vmem:[%s357] sm:$0xff]
    %v359 = vld [vmem:[%s357 + $0x8] sm:$0xff]
    %v360 = vld [vmem:[%s357 + $0x10] sm:$0xff]
    %v361 = vld [vmem:[%s357 + $0x18] sm:$0xff]
    %v363 = vsel %vm189, %v356, 0
    %365 = vmatprep.subr.mxu0 0.0
    %366 = vmatpush1.msra.mxu0 %v358
    %367 = vmatprep.subr.mxu0 0.0
    %368 = vmatpush1.msra.mxu0 %v359
    %369 = vmatprep.subr.mxu0 0.0
    %370 = vmatpush1.msra.mxu0 %v360
    %371 = vmatprep.subr.mxu0 0.0
    %372 = vmatpush1.msra.mxu0 %v361
    %373 = vmatprep.subr.mxu0 0.0
    %374 = vmatpush1.msra.mxu0 0.0
    %375 = vmatprep.subr.mxu0 0.0
    %376 = vmatpush1.msra.mxu0 0.0
    %377 = vmatprep.subr.mxu0 0.0
    %378 = vmatpush1.msra.mxu0 0.0
    %379 = vmatprep.subr.mxu0 0.0
    %380 = vmatpush1.msra.mxu0 0.0
    %381 = vmatprep.subr.mxu0 0.0
    %382 = vmatpush1.msra.mxu0 0.0
    %383 = vmatprep.subr.mxu0 0.0
    %384 = vmatpush1.msra.mxu0 0.0
    %385 = vmatprep.subr.mxu0 0.0
    %386 = vmatpush1.msra.mxu0 0.0
    %387 = vmatprep.subr.mxu0 0.0
    %388 = vmatpush1.msra.mxu0 0.0
    %389 = vmatprep.subr.mxu0 0.0
    %390 = vmatpush1.msra.mxu0 0.0
    %391 = vmatprep.subr.mxu0 0.0
    %392 = vmatpush1.msra.mxu0 0.0
    %393 = vmatprep.subr.mxu0 0.0
    %394 = vmatpush1.msra.mxu0 0.0
    %395 = vmatprep.subr.mxu0 0.0
    %396 = vmatpush1.msra.mxu0 0.0
    %397 = vmatprep.subr.mxu0 0.0
    %398 = vmatpush1.msra.mxu0 0.0
    %399 = vmatprep.subr.mxu0 0.0
    %400 = vmatpush1.msra.mxu0 0.0
    %401 = vmatprep.subr.mxu0 0.0
    %402 = vmatpush1.msra.mxu0 0.0
    %403 = vmatprep.subr.mxu0 0.0
    %404 = vmatpush1.msra.mxu0 0.0
    %405 = vmatprep.subr.mxu0 0.0
    %406 = vmatpush1.msra.mxu0 0.0
    %407 = vmatprep.subr.mxu0 0.0
    %408 = vmatpush1.msra.mxu0 0.0
    %409 = vmatprep.subr.mxu0 0.0
    %410 = vmatpush1.msra.mxu0 0.0
    %411 = vmatprep.subr.mxu0 0.0
    %412 = vmatpush1.msra.mxu0 0.0
    %413 = vmatprep.subr.mxu0 0.0
    %414 = vmatpush1.msra.mxu0 0.0
    %415 = vmatprep.subr.mxu0 0.0
    %416 = vmatpush1.msra.mxu0 0.0
    %417 = vmatprep.subr.mxu0 0.0
    %418 = vmatpush1.msra.mxu0 0.0
    %419 = vmatprep.subr.mxu0 0.0
    %420 = vmatpush1.msra.mxu0 0.0
    %421 = vmatprep.subr.mxu0 0.0
    %422 = vmatpush1.msra.mxu0 0.0
    %423 = vmatprep.subr.mxu0 0.0
    %424 = vmatpush1.msra.mxu0 0.0
    %425 = vmatprep.subr.mxu0 0.0
    %426 = vmatpush1.msra.mxu0 0.0
    %427 = vmatprep.subr.mxu0 0.0
    %428 = vmatpush1.msra.mxu0 0.0
    %429 = vmatprep.mubr.f32.mxu0 0.0
    %430 = vmatmul.mubr.f32.gmra.mrb[0].mxu0 %v363
    %v431 = vpop.f32.mrb[0].mxu0
    %v432 = vadd.f32 %v139, %v431
    %v433 = vpop.f32.mrb[0].mxu0
    %434 = vdwg.mxu0
    %v435 = vadd.f32 %v356, %v432
    %v436 = vxor.u32 %v435, 2147483648
    %v437 = vmul.f32 %v436, 1.442695
    %v438 = vpow.pop %v437
    %v439 = vadd.f32 %v438, 1.0
    %v440 = vrcp.pop %v439
    %v441 = vmul.f32 1.0, %v440
    %v442 = vmul.f32 %v435, %v441
    %s443 = scalar_lea.vmem [#allocation2], 96
    %v444 = vld [vmem:[%s443] sm:$0xff]
    %v445 = vld [vmem:[%s443 + $0x8] sm:$0xff]
    %v446 = vld [vmem:[%s443 + $0x10] sm:$0xff]
    %v447 = vld [vmem:[%s443 + $0x18] sm:$0xff]
    %v449 = vsel %vm189, %v442, 0
    %451 = vmatprep.subr.mxu0 0.0
    %452 = vmatpush1.msra.mxu0 %v444
    %453 = vmatprep.subr.mxu0 0.0
    %454 = vmatpush1.msra.mxu0 %v445
    %455 = vmatprep.subr.mxu0 0.0
    %456 = vmatpush1.msra.mxu0 %v446
    %457 = vmatprep.subr.mxu0 0.0
    %458 = vmatpush1.msra.mxu0 %v447
    %459 = vmatprep.subr.mxu0 0.0
    %460 = vmatpush1.msra.mxu0 0.0
    %461 = vmatprep.subr.mxu0 0.0
    %462 = vmatpush1.msra.mxu0 0.0
    %463 = vmatprep.subr.mxu0 0.0
    %464 = vmatpush1.msra.mxu0 0.0
    %465 = vmatprep.subr.mxu0 0.0
    %466 = vmatpush1.msra.mxu0 0.0
    %467 = vmatprep.subr.mxu0 0.0
    %468 = vmatpush1.msra.mxu0 0.0
    %469 = vmatprep.subr.mxu0 0.0
    %470 = vmatpush1.msra.mxu0 0.0
    %471 = vmatprep.subr.mxu0 0.0
    %472 = vmatpush1.msra.mxu0 0.0
    %473 = vmatprep.subr.mxu0 0.0
    %474 = vmatpush1.msra.mxu0 0.0
    %475 = vmatprep.subr.mxu0 0.0
    %476 = vmatpush1.msra.mxu0 0.0
    %477 = vmatprep.subr.mxu0 0.0
    %478 = vmatpush1.msra.mxu0 0.0
    %479 = vmatprep.subr.mxu0 0.0
    %480 = vmatpush1.msra.mxu0 0.0
    %481 = vmatprep.subr.mxu0 0.0
    %482 = vmatpush1.msra.mxu0 0.0
    %483 = vmatprep.subr.mxu0 0.0
    %484 = vmatpush1.msra.mxu0 0.0
    %485 = vmatprep.subr.mxu0 0.0
    %486 = vmatpush1.msra.mxu0 0.0
    %487 = vmatprep.subr.mxu0 0.0
    %488 = vmatpush1.msra.mxu0 0.0
    %489 = vmatprep.subr.mxu0 0.0
    %490 = vmatpush1.msra.mxu0 0.0
    %491 = vmatprep.subr.mxu0 0.0
    %492 = vmatpush1.msra.mxu0 0.0
    %493 = vmatprep.subr.mxu0 0.0
    %494 = vmatpush1.msra.mxu0 0.0
    %495 = vmatprep.subr.mxu0 0.0
    %496 = vmatpush1.msra.mxu0 0.0
    %497 = vmatprep.subr.mxu0 0.0
    %498 = vmatpush1.msra.mxu0 0.0
    %499 = vmatprep.subr.mxu0 0.0
    %500 = vmatpush1.msra.mxu0 0.0
    %501 = vmatprep.subr.mxu0 0.0
    %502 = vmatpush1.msra.mxu0 0.0
    %503 = vmatprep.subr.mxu0 0.0
    %504 = vmatpush1.msra.mxu0 0.0
    %505 = vmatprep.subr.mxu0 0.0
    %506 = vmatpush1.msra.mxu0 0.0
    %507 = vmatprep.subr.mxu0 0.0
    %508 = vmatpush1.msra.mxu0 0.0
    %509 = vmatprep.subr.mxu0 0.0
    %510 = vmatpush1.msra.mxu0 0.0
    %511 = vmatprep.subr.mxu0 0.0
    %512 = vmatpush1.msra.mxu0 0.0
    %513 = vmatprep.subr.mxu0 0.0
    %514 = vmatpush1.msra.mxu0 0.0
    %515 = vmatprep.mubr.f32.mxu0 0.0
    %516 = vmatmul.mubr.f32.gmra.mrb[0].mxu0 %v449
    %v517 = vpop.f32.mrb[0].mxu0
    %v518 = vadd.f32 %v140, %v517
    %v519 = vpop.f32.mrb[0].mxu0
    %520 = vdwg.mxu0
    %v521 = vadd.f32 %v442, %v518
    %v522 = vxor.u32 %v521, 2147483648
    %v523 = vmul.f32 %v522, 1.442695
    %v524 = vpow.pop %v523
    %v525 = vadd.f32 %v524, 1.0
    %v526 = vrcp.pop %v525
    %v527 = vmul.f32 1.0, %v526
    %v528 = vmul.f32 %v521, %v527
    %v529 = vld [vmem:[%s8] sm:$0xff]
    %v530 = vld [vmem:[%s8 + $0x8] sm:$0xff]
    %v531 = vld [vmem:[%s8 + $0x10] sm:$0xff]
    %v532 = vld [vmem:[%s8 + $0x18] sm:$0xff]
    %v534 = vsel %vm189, %v528, 0
    %536 = vmatprep.subr.mxu0 0.0
    %537 = vmatpush1.msra.mxu0 %v529
    %538 = vmatprep.subr.mxu0 0.0
    %539 = vmatpush1.msra.mxu0 %v530
    %540 = vmatprep.subr.mxu0 0.0
    %541 = vmatpush1.msra.mxu0 %v531
    %542 = vmatprep.subr.mxu0 0.0
    %543 = vmatpush1.msra.mxu0 %v532
    %544 = vmatprep.subr.mxu0 0.0
    %545 = vmatpush1.msra.mxu0 0.0
    %546 = vmatprep.subr.mxu0 0.0
    %547 = vmatpush1.msra.mxu0 0.0
    %548 = vmatprep.subr.mxu0 0.0
    %549 = vmatpush1.msra.mxu0 0.0
    %550 = vmatprep.subr.mxu0 0.0
    %551 = vmatpush1.msra.mxu0 0.0
    %552 = vmatprep.subr.mxu0 0.0
    %553 = vmatpush1.msra.mxu0 0.0
    %554 = vmatprep.subr.mxu0 0.0
    %555 = vmatpush1.msra.mxu0 0.0
    %556 = vmatprep.subr.mxu0 0.0
    %557 = vmatpush1.msra.mxu0 0.0
    %558 = vmatprep.subr.mxu0 0.0
    %559 = vmatpush1.msra.mxu0 0.0
    %560 = vmatprep.subr.mxu0 0.0
    %561 = vmatpush1.msra.mxu0 0.0
    %562 = vmatprep.subr.mxu0 0.0
    %563 = vmatpush1.msra.mxu0 0.0
    %564 = vmatprep.subr.mxu0 0.0
    %565 = vmatpush1.msra.mxu0 0.0
    %566 = vmatprep.subr.mxu0 0.0
    %567 = vmatpush1.msra.mxu0 0.0
    %568 = vmatprep.subr.mxu0 0.0
    %569 = vmatpush1.msra.mxu0 0.0
    %570 = vmatprep.subr.mxu0 0.0
    %571 = vmatpush1.msra.mxu0 0.0
    %572 = vmatprep.subr.mxu0 0.0
    %573 = vmatpush1.msra.mxu0 0.0
    %574 = vmatprep.subr.mxu0 0.0
    %575 = vmatpush1.msra.mxu0 0.0
    %576 = vmatprep.subr.mxu0 0.0
    %577 = vmatpush1.msra.mxu0 0.0
    %578 = vmatprep.subr.mxu0 0.0
    %579 = vmatpush1.msra.mxu0 0.0
    %580 = vmatprep.subr.mxu0 0.0
    %581 = vmatpush1.msra.mxu0 0.0
    %582 = vmatprep.subr.mxu0 0.0
    %583 = vmatpush1.msra.mxu0 0.0
    %584 = vmatprep.subr.mxu0 0.0
    %585 = vmatpush1.msra.mxu0 0.0
    %586 = vmatprep.subr.mxu0 0.0
    %587 = vmatpush1.msra.mxu0 0.0
    %588 = vmatprep.subr.mxu0 0.0
    %589 = vmatpush1.msra.mxu0 0.0
    %590 = vmatprep.subr.mxu0 0.0
    %591 = vmatpush1.msra.mxu0 0.0
    %592 = vmatprep.subr.mxu0 0.0
    %593 = vmatpush1.msra.mxu0 0.0
    %594 = vmatprep.subr.mxu0 0.0
    %595 = vmatpush1.msra.mxu0 0.0
    %596 = vmatprep.subr.mxu0 0.0
    %597 = vmatpush1.msra.mxu0 0.0
    %598 = vmatprep.subr.mxu0 0.0
    %599 = vmatpush1.msra.mxu0 0.0
    %600 = vmatprep.mubr.f32.mxu0 0.0
    %601 = vmatmul.mubr.f32.gmra.mrb[0].mxu0 %v534
    %v602 = vpop.f32.mrb[0].mxu0
    %v603 = vadd.f32 %v156, %v602
    %v604 = vpop.f32.mrb[0].mxu0
    %605 = vdwg.mxu0
    %606 = vst [vmem:[#allocation5] sm:$0xff] %v603
    // Predicated region
    $region50: #{tpu_custom_call.1} parent=1 // pred_check
      _
    $region51: #{tpu_custom_call.1} parent=1 // pred_check_branch
      %608 = sbr.rel (0) target = $region53
    $region52: #{tpu_custom_call.1} parent=1 // pred_region
      %s610 = ssub.s32 128, 128
      %611 = vsyncadd [#allocation4], %s610
      %s613 = sshll.u32 [#allocation5], 4
      %s614 = int_to_ptr.vmem [resolvable:$true] %s613
      %616 = dma.vmem_to_hbm [thread:$0]  %s614, 128, %s11, [#allocation4]
    $region53: #{tpu_custom_call.1} parent=1 // pred_fallthru
      _
    // Predicated region
    $region54: #{tpu_custom_call.1} parent=1 // pred_check
      _
    $region55: #{tpu_custom_call.1} parent=1 // pred_check_branch
      %618 = sbr.rel (0) target = $region57
    $region56: #{tpu_custom_call.1} parent=1 // pred_region
      %619 = dma.done [#allocation4], 128
    $region57: #{tpu_custom_call.1} parent=1 // pred_fallthru
      _
    %620 = vsyncpa [#allocation3], 1
    %621 = vsyncpa [#allocation4], 1

</llo_original>
